<compile_context>
chip_gen: v6e
topology: v6e:2x2x1
jax: 0.10.0
libtpu: 0.0.40
codegen_flags: <defaults>
</compile_context>

<pallas_src>
import numpy as np
import jax
import jax.numpy as jnp
from jax.experimental import pallas as pl
from jax.experimental.pallas import tpu as pltpu


# ----------------------------------------------------------------------------- kernel
def _cbam_kernel(x_ref, w1m_ref, b1m_ref, w2m_ref, b2m_ref,
                 w1a_ref, b1a_ref, w2a_ref, b2a_ref,
                 mconv_ref, bc_ref, out_ref):
    f32 = jnp.float32
    x = x_ref[...].astype(f32)                       # (bb, C, HW)  lane-dense
    bb, C, HW = x.shape

    # ------------------------- channel attention -------------------------
    mx = jnp.max(x, axis=2)                          # (bb, C)   lane reduction
    av = jnp.sum(x, axis=2) * (1.0 / HW)             # (bb, C)

    def mlp(v, w1_ref, b1_ref, w2_ref, b2_ref):
        # v: (bb, C); w1: (Ch, C); b1: (1, Ch); w2: (C, Ch); b2: (1, C)
        h = jnp.sum(v[:, None, :] * w1_ref[...], axis=2) + b1_ref[...]   # (bb, Ch)
        h = jnp.maximum(h, 0.0)
        o = jnp.sum(h[:, None, :] * w2_ref[...], axis=2) + b2_ref[...]   # (bb, C)
        return jax.nn.sigmoid(o)

    mw = mlp(mx, w1m_ref, b1m_ref, w2m_ref, b2m_ref)                     # (bb, C)
    aw = mlp(av, w1a_ref, b1a_ref, w2a_ref, b2a_ref)                     # (bb, C)
    mc = jax.nn.sigmoid(mw + aw)                                         # (bb, C)
    x1 = mc[:, :, None] * x                                              # (bb, C, HW)

    # ------------------------- spatial attention -------------------------
    sp_max = jnp.max(x1, axis=1)                                         # (bb, HW)
    sp_avg = jnp.sum(x1, axis=1) * (1.0 / C)                             # (bb, HW)
    sp = jnp.concatenate([sp_max, sp_avg], axis=1)                       # (bb, 2*HW)

    # one dense, lane-aligned MXU matmul for the whole 7x7 "same" conv
    acc = jnp.dot(sp, mconv_ref[...], preferred_element_type=f32) + bc_ref[0, 0]
    ms = jax.nn.sigmoid(acc)                                             # (bb, HW)
    out_sam = ms[:, None, :] * x1                                        # (bb, C, HW)

    # ------------------- concat([sam_out, original x], C) ----------------
    # written as two direct slice stores (no in-kernel concatenate)
    out_ref[:, :C, :] = out_sam.astype(out_ref.dtype)
    out_ref[:, C:, :] = x_ref[...]


# ----------------------------------------------------------------------------- wrapper
def _shift_matrix(n: int, d: int) -> np.ndarray:
    """S(d)[a, b] = 1 iff b == a + d  (zero-padding shift along an axis)."""
    i = np.arange(n)
    return (i[None, :] == i[:, None] + d).astype(np.float32)


@jax.jit
def cbam_forward(x: jax.Array, params: dict) -> jax.Array:
    B, C, H, W = x.shape
    HW = H * W
    f32 = jnp.float32
    Ch = params["l1m_w"].shape[0]            # hidden width = int(C * r)

    # lane-dense view of the input (free metadata reshape)
    x2 = x.reshape(B, C, HW)

    # --- channel-MLP params: plain 2-D layouts (reduced dim on lanes) --------
    def prep_mlp(w1, b1, w2, b2):
        return (w1.astype(f32),                   # (Ch, C)
                b1.astype(f32).reshape(1, -1),    # (1, Ch)
                w2.astype(f32),                   # (C, Ch)
                b2.astype(f32).reshape(1, -1))    # (1, C)

    w1m, b1m, w2m, b2m = prep_mlp(params["l1m_w"], params["l1m_b"],
                                  params["l2m_w"], params["l2m_b"])
    w1a, b1a, w2a, b2a = prep_mlp(params["l1a_w"], params["l1a_b"],
                                  params["l2a_w"], params["l2a_b"])

    # --- 7x7 zero-padded conv folded into a single dense (2*HW, HW) matrix ---
    K = 7
    P = K // 2
    assert 2 * HW * HW * 4 <= (16 << 20), (
        "dense conv matrix too large for VMEM at this H, W")
    # TODO(synk): for large H, W (>= ~64x64) switch back to the per-kh Toeplitz
    # factorization (or tile the conv matrix over output columns) to fit VMEM.
    A = np.stack([_shift_matrix(H, kh - P).T for kh in range(K)])    # (K,H,H)  A[kh][u,i]
    Bw = np.stack([_shift_matrix(W, kw - P).T for kw in range(K)])   # (K,W,W)  B[kw][v,j]
    # r[c, kh, v, j] = sum_kw conv_w[0, c, kh, kw] * B[kw, v, j]
    r = jnp.einsum("chw,wvj->chvj", params["conv_w"][0].astype(f32),
                   jnp.asarray(Bw))                                  # (2,K,W,W)
    # Mconv[c, (u,v), (i,j)] = sum_kh A[kh,u,i] * r[c,kh,v,j]
    mconv = jnp.einsum("hui,chvj->cuvij", jnp.asarray(A), r).reshape(2 * HW, HW)
    bc = params["conv_b"].astype(f32).reshape(1, 1)                  # SMEM scalar

    # --- batch tiling: at most 2 "parallel" grid steps ------------------------
    bb = B // 2 if (B > 1 and B % 2 == 0) else B
    nsteps = B // bb

    itemsize = jnp.dtype(x.dtype).itemsize
    cost = pl.CostEstimate(
        flops=int(B * (4 * HW * HW + 10 * C * HW)),
        transcendentals=int(B * (3 * C + HW)),
        bytes_accessed=int(3 * B * C * HW * itemsize + 2 * HW * HW * 4 + 4096),
    )

    out2 = pl.pallas_call(
        _cbam_kernel,
        out_shape=jax.ShapeDtypeStruct((B, 2 * C, HW), x.dtype),
        grid_spec=pltpu.PrefetchScalarGridSpec(
            num_scalar_prefetch=0,
            grid=(nsteps,),
            in_specs=[
                pl.BlockSpec((bb, C, HW), lambda b: (b, 0, 0)),       # x (lane-dense)
                pl.BlockSpec((Ch, C), lambda b: (0, 0)),              # W1 (max branch)
                pl.BlockSpec((1, Ch), lambda b: (0, 0)),              # b1
                pl.BlockSpec((C, Ch), lambda b: (0, 0)),              # W2
                pl.BlockSpec((1, C), lambda b: (0, 0)),               # b2
                pl.BlockSpec((Ch, C), lambda b: (0, 0)),              # W1 (avg branch)
                pl.BlockSpec((1, Ch), lambda b: (0, 0)),              # b1
                pl.BlockSpec((C, Ch), lambda b: (0, 0)),              # W2
                pl.BlockSpec((1, C), lambda b: (0, 0)),               # b2
                pl.BlockSpec((2 * HW, HW), lambda b: (0, 0)),         # dense conv matrix
                pl.BlockSpec(memory_space=pltpu.MemorySpace.SMEM),    # conv bias scalar
            ],
            out_specs=pl.BlockSpec((bb, 2 * C, HW), lambda b: (b, 0, 0)),
        ),
        compiler_params=pltpu.CompilerParams(
            dimension_semantics=("parallel",)),
        cost_estimate=cost,
    )(x2, w1m, b1m, w2m, b2m, w1a, b1a, w2a, b2a, mconv, bc)

    return out2.reshape(B, 2 * C, H, W)


# ----------------------------------------------------------------------------- reference
def cbam_ref(x: jax.Array, params: dict) -> jax.Array:
    """Pure-JAX reference matching the PyTorch CBAM forward."""
    f32 = jnp.float32
    xf = x.astype(f32)

    def mlp(v, w1, b1, w2, b2):
        h = jax.nn.relu(v @ w1.astype(f32).T + b1.astype(f32))
        return jax.nn.sigmoid(h @ w2.astype(f32).T + b2.astype(f32))

    mx = jnp.max(xf, axis=(2, 3))
    av = jnp.mean(xf, axis=(2, 3))
    mw = mlp(mx, params["l1m_w"], params["l1m_b"], params["l2m_w"], params["l2m_b"])
    aw = mlp(av, params["l1a_w"], params["l1a_b"], params["l2a_w"], params["l2a_b"])
    mc = jax.nn.sigmoid(mw + aw)[:, :, None, None]
    x1 = mc * xf

    sp = jnp.concatenate([jnp.max(x1, axis=1, keepdims=True),
                          jnp.mean(x1, axis=1, keepdims=True)], axis=1)
    conv = jax.lax.conv_general_dilated(
        sp, params["conv_w"].astype(f32), window_strides=(1, 1),
        padding=((3, 3), (3, 3)), dimension_numbers=("NCHW", "OIHW", "NCHW"))
    conv = conv + params["conv_b"].astype(f32)[None, :, None, None]
    ms = jax.nn.sigmoid(conv)
    out = ms * x1
    return jnp.concatenate([out, xf], axis=1).astype(x.dtype)


# ----------------------------------------------------------------------------- main
if __name__ == "__main__":
    key = jax.random.PRNGKey(0)
    ks = jax.random.split(key, 11)
    B, C, H, W = 2, 4, 16, 16
    r = 0.5
    Ch = int(C * r)

    def rnd(k, shape, scale=0.5):
        return scale * jax.random.normal(k, shape, dtype=jnp.float32)

    x = jax.random.normal(ks[0], (B, C, H, W), dtype=jnp.float32)
    params = {
        "l1m_w": rnd(ks[1], (Ch, C)), "l1m_b": rnd(ks[2], (Ch,), 0.1),
        "l2m_w": rnd(ks[3], (C, Ch)), "l2m_b": rnd(ks[4], (C,), 0.1),
        "l1a_w": rnd(ks[5], (Ch, C)), "l1a_b": rnd(ks[6], (Ch,), 0.1),
        "l2a_w": rnd(ks[7], (C, Ch)), "l2a_b": rnd(ks[8], (C,), 0.1),
        "conv_w": rnd(ks[9], (1, 2, 7, 7), 0.2),
        "conv_b": rnd(ks[10], (1,), 0.1),
    }

    y = cbam_forward(x, params)
    y = jax.block_until_ready(y)

    y_ref = cbam_ref(x, params)
    assert y.shape == (B, 2 * C, H, W), y.shape
    assert y.dtype == x.dtype
    assert jnp.allclose(y, y_ref, atol=1e-5, rtol=1e-5), \
        float(jnp.max(jnp.abs(y - y_ref)))

    print("KERNEL_OK")
</pallas_src>

<mosaic_0001>
module attributes {stable_mosaic.version = 11 : i64} {
  func.func @_cbam_kernel(%arg0: i32, %arg1: memref<1x4x256xf32, #tpu.memory_space<vmem>>, %arg2: memref<2x4xf32, #tpu.memory_space<vmem>>, %arg3: memref<1x2xf32, #tpu.memory_space<vmem>>, %arg4: memref<4x2xf32, #tpu.memory_space<vmem>>, %arg5: memref<1x4xf32, #tpu.memory_space<vmem>>, %arg6: memref<2x4xf32, #tpu.memory_space<vmem>>, %arg7: memref<1x2xf32, #tpu.memory_space<vmem>>, %arg8: memref<4x2xf32, #tpu.memory_space<vmem>>, %arg9: memref<1x4xf32, #tpu.memory_space<vmem>>, %arg10: memref<512x256xf32, #tpu.memory_space<vmem>>, %arg11: memref<1x1xf32, #tpu.memory_space<smem>>, %arg12: memref<1x8x256xf32, #tpu.memory_space<vmem>>) attributes {dimension_semantics = [#tpu.dimension_semantics<parallel>], iteration_bounds = array<i64: 2>, scalar_prefetch = 0 : i64, scratch_operands = 0 : i64, tpu.core_type = #tpu.core_type<tc>, window_params = [{transform_indices = @transform_0, window_bounds = array<i64: 1, 4, 256>}, {pipeline_mode = #tpu.pipeline_mode<synchronous>, transform_indices = @transform_1, window_bounds = array<i64: 2, 4>}, {pipeline_mode = #tpu.pipeline_mode<synchronous>, transform_indices = @transform_2, window_bounds = array<i64: 1, 2>}, {pipeline_mode = #tpu.pipeline_mode<synchronous>, transform_indices = @transform_3, window_bounds = array<i64: 4, 2>}, {pipeline_mode = #tpu.pipeline_mode<synchronous>, transform_indices = @transform_4, window_bounds = array<i64: 1, 4>}, {pipeline_mode = #tpu.pipeline_mode<synchronous>, transform_indices = @transform_5, window_bounds = array<i64: 2, 4>}, {pipeline_mode = #tpu.pipeline_mode<synchronous>, transform_indices = @transform_6, window_bounds = array<i64: 1, 2>}, {pipeline_mode = #tpu.pipeline_mode<synchronous>, transform_indices = @transform_7, window_bounds = array<i64: 4, 2>}, {pipeline_mode = #tpu.pipeline_mode<synchronous>, transform_indices = @transform_8, window_bounds = array<i64: 1, 4>}, {pipeline_mode = #tpu.pipeline_mode<synchronous>, transform_indices = @transform_9, window_bounds = array<i64: 512, 256>}, {transform_indices = @transform_10, window_bounds = array<i64: 1, 1>}, {transform_indices = @transform_11, window_bounds = array<i64: 1, 8, 256>}]} {
    %c0 = arith.constant 0 : index
    %c0_0 = arith.constant 0 : index
    %c0_1 = arith.constant 0 : index
    %0 = vector.load %arg1[%c0, %c0_0, %c0_1] : memref<1x4x256xf32, #tpu.memory_space<vmem>>, vector<1x4x256xf32>
    %cst = arith.constant dense<0xFF800000> : vector<1x4xf32>
    %1 = vector.multi_reduction <maximumf>, %0, %cst [2] : vector<1x4x256xf32> to vector<1x4xf32>
    %cst_2 = arith.constant dense<0.000000e+00> : vector<1x4xf32>
    %2 = vector.multi_reduction <add>, %0, %cst_2 [2] : vector<1x4x256xf32> to vector<1x4xf32>
    %cst_3 = arith.constant 3.906250e-03 : f32
    %3 = vector.broadcast %cst_3 : f32 to vector<1x4xf32>
    %4 = arith.mulf %2, %3 : vector<1x4xf32>
    %5 = vector.shape_cast %1 : vector<1x4xf32> to vector<1x1x4xf32>
    %c0_4 = arith.constant 0 : index
    %c0_5 = arith.constant 0 : index
    %6 = vector.load %arg2[%c0_4, %c0_5] : memref<2x4xf32, #tpu.memory_space<vmem>>, vector<2x4xf32>
    %7 = vector.shape_cast %6 : vector<2x4xf32> to vector<1x2x4xf32>
    %8 = vector.broadcast %5 : vector<1x1x4xf32> to vector<1x2x4xf32>
    %9 = arith.mulf %8, %7 : vector<1x2x4xf32>
    %cst_6 = arith.constant dense<0.000000e+00> : vector<1x2xf32>
    %10 = vector.multi_reduction <add>, %9, %cst_6 [2] : vector<1x2x4xf32> to vector<1x2xf32>
    %c0_7 = arith.constant 0 : index
    %c0_8 = arith.constant 0 : index
    %11 = vector.load %arg3[%c0_7, %c0_8] : memref<1x2xf32, #tpu.memory_space<vmem>>, vector<1x2xf32>
    %12 = arith.addf %10, %11 : vector<1x2xf32>
    %cst_9 = arith.constant 0.000000e+00 : f32
    %13 = vector.broadcast %cst_9 : f32 to vector<1x2xf32>
    %14 = arith.maximumf %12, %13 : vector<1x2xf32>
    %15 = vector.shape_cast %14 : vector<1x2xf32> to vector<1x1x2xf32>
    %c0_10 = arith.constant 0 : index
    %c0_11 = arith.constant 0 : index
    %16 = vector.load %arg4[%c0_10, %c0_11] : memref<4x2xf32, #tpu.memory_space<vmem>>, vector<4x2xf32>
    %17 = vector.shape_cast %16 : vector<4x2xf32> to vector<1x4x2xf32>
    %18 = vector.broadcast %15 : vector<1x1x2xf32> to vector<1x4x2xf32>
    %19 = arith.mulf %18, %17 : vector<1x4x2xf32>
    %cst_12 = arith.constant dense<0.000000e+00> : vector<1x4xf32>
    %20 = vector.multi_reduction <add>, %19, %cst_12 [2] : vector<1x4x2xf32> to vector<1x4xf32>
    %c0_13 = arith.constant 0 : index
    %c0_14 = arith.constant 0 : index
    %21 = vector.load %arg5[%c0_13, %c0_14] : memref<1x4xf32, #tpu.memory_space<vmem>>, vector<1x4xf32>
    %22 = arith.addf %20, %21 : vector<1x4xf32>
    %23 = arith.negf %22 : vector<1x4xf32>
    %24 = math.exp %23 : vector<1x4xf32>
    %cst_15 = arith.constant 1.000000e+00 : f32
    %25 = vector.broadcast %cst_15 : f32 to vector<1x4xf32>
    %26 = arith.addf %25, %24 : vector<1x4xf32>
    %27 = arith.divf %25, %26 : vector<1x4xf32>
    %28 = vector.shape_cast %4 : vector<1x4xf32> to vector<1x1x4xf32>
    %c0_16 = arith.constant 0 : index
    %c0_17 = arith.constant 0 : index
    %29 = vector.load %arg6[%c0_16, %c0_17] : memref<2x4xf32, #tpu.memory_space<vmem>>, vector<2x4xf32>
    %30 = vector.shape_cast %29 : vector<2x4xf32> to vector<1x2x4xf32>
    %31 = vector.broadcast %28 : vector<1x1x4xf32> to vector<1x2x4xf32>
    %32 = arith.mulf %31, %30 : vector<1x2x4xf32>
    %cst_18 = arith.constant dense<0.000000e+00> : vector<1x2xf32>
    %33 = vector.multi_reduction <add>, %32, %cst_18 [2] : vector<1x2x4xf32> to vector<1x2xf32>
    %c0_19 = arith.constant 0 : index
    %c0_20 = arith.constant 0 : index
    %34 = vector.load %arg7[%c0_19, %c0_20] : memref<1x2xf32, #tpu.memory_space<vmem>>, vector<1x2xf32>
    %35 = arith.addf %33, %34 : vector<1x2xf32>
    %cst_21 = arith.constant 0.000000e+00 : f32
    %36 = vector.broadcast %cst_21 : f32 to vector<1x2xf32>
    %37 = arith.maximumf %35, %36 : vector<1x2xf32>
    %38 = vector.shape_cast %37 : vector<1x2xf32> to vector<1x1x2xf32>
    %c0_22 = arith.constant 0 : index
    %c0_23 = arith.constant 0 : index
    %39 = vector.load %arg8[%c0_22, %c0_23] : memref<4x2xf32, #tpu.memory_space<vmem>>, vector<4x2xf32>
    %40 = vector.shape_cast %39 : vector<4x2xf32> to vector<1x4x2xf32>
    %41 = vector.broadcast %38 : vector<1x1x2xf32> to vector<1x4x2xf32>
    %42 = arith.mulf %41, %40 : vector<1x4x2xf32>
    %cst_24 = arith.constant dense<0.000000e+00> : vector<1x4xf32>
    %43 = vector.multi_reduction <add>, %42, %cst_24 [2] : vector<1x4x2xf32> to vector<1x4xf32>
    %c0_25 = arith.constant 0 : index
    %c0_26 = arith.constant 0 : index
    %44 = vector.load %arg9[%c0_25, %c0_26] : memref<1x4xf32, #tpu.memory_space<vmem>>, vector<1x4xf32>
    %45 = arith.addf %43, %44 : vector<1x4xf32>
    %46 = arith.negf %45 : vector<1x4xf32>
    %47 = math.exp %46 : vector<1x4xf32>
    %cst_27 = arith.constant 1.000000e+00 : f32
    %48 = vector.broadcast %cst_27 : f32 to vector<1x4xf32>
    %49 = arith.addf %48, %47 : vector<1x4xf32>
    %50 = arith.divf %48, %49 : vector<1x4xf32>
    %51 = arith.addf %27, %50 : vector<1x4xf32>
    %52 = arith.negf %51 : vector<1x4xf32>
    %53 = math.exp %52 : vector<1x4xf32>
    %cst_28 = arith.constant 1.000000e+00 : f32
    %54 = vector.broadcast %cst_28 : f32 to vector<1x4xf32>
    %55 = arith.addf %54, %53 : vector<1x4xf32>
    %56 = arith.divf %54, %55 : vector<1x4xf32>
    %57 = vector.shape_cast %56 : vector<1x4xf32> to vector<1x4x1xf32>
    %58 = vector.broadcast %57 : vector<1x4x1xf32> to vector<1x4x256xf32>
    %59 = arith.mulf %58, %0 : vector<1x4x256xf32>
    %cst_29 = arith.constant dense<0xFF800000> : vector<1x256xf32>
    %60 = vector.multi_reduction <maximumf>, %59, %cst_29 [1] : vector<1x4x256xf32> to vector<1x256xf32>
    %cst_30 = arith.constant dense<0.000000e+00> : vector<1x256xf32>
    %61 = vector.multi_reduction <add>, %59, %cst_30 [1] : vector<1x4x256xf32> to vector<1x256xf32>
    %cst_31 = arith.constant 2.500000e-01 : f32
    %62 = vector.broadcast %cst_31 : f32 to vector<1x256xf32>
    %63 = arith.mulf %61, %62 : vector<1x256xf32>
    %64 = tpu.concatenate %60, %63 in 1 : vector<1x256xf32>, vector<1x256xf32> -> vector<1x512xf32>
    %c0_32 = arith.constant 0 : index
    %c0_33 = arith.constant 0 : index
    %65 = vector.load %arg10[%c0_32, %c0_33] : memref<512x256xf32, #tpu.memory_space<vmem>>, vector<512x256xf32>
    %cst_34 = arith.constant dense<0.000000e+00> : vector<1x256xf32>
    %66 = tpu.matmul %64, %65, %cst_34 {dimension_numbers = #tpu.dot_dimension_numbers<[1], [0], [0], [1], [0, 0, 1, 1], [], []>} : vector<1x512xf32>, vector<512x256xf32>, vector<1x256xf32> -> vector<1x256xf32>
    %c0_35 = arith.constant 0 : index
    %c0_36 = arith.constant 0 : index
    %67 = memref.load %arg11[%c0_35, %c0_36] : memref<1x1xf32, #tpu.memory_space<smem>>
    %68 = vector.broadcast %67 : f32 to vector<1x256xf32>
    %69 = arith.addf %66, %68 : vector<1x256xf32>
    %70 = arith.negf %69 : vector<1x256xf32>
    %71 = math.exp %70 : vector<1x256xf32>
    %cst_37 = arith.constant 1.000000e+00 : f32
    %72 = vector.broadcast %cst_37 : f32 to vector<1x256xf32>
    %73 = arith.addf %72, %71 : vector<1x256xf32>
    %74 = arith.divf %72, %73 : vector<1x256xf32>
    %75 = vector.shape_cast %74 : vector<1x256xf32> to vector<1x1x256xf32>
    %76 = vector.broadcast %75 : vector<1x1x256xf32> to vector<1x4x256xf32>
    %77 = arith.mulf %76, %59 : vector<1x4x256xf32>
    %c0_38 = arith.constant 0 : index
    %c0_39 = arith.constant 0 : index
    %c0_40 = arith.constant 0 : index
    %78 = vector.load %arg12[%c0_38, %c0_39, %c0_40] : memref<1x8x256xf32, #tpu.memory_space<vmem>>, vector<1x4x256xf32>
    tpu.vector_store %arg12[%c0_38, %c0_39, %c0_40], %77 {strides = array<i32>} : memref<1x8x256xf32, #tpu.memory_space<vmem>>, vector<1x4x256xf32>,
    %c0_41 = arith.constant 0 : index
    %c0_42 = arith.constant 0 : index
    %c0_43 = arith.constant 0 : index
    %79 = vector.load %arg1[%c0_41, %c0_42, %c0_43] : memref<1x4x256xf32, #tpu.memory_space<vmem>>, vector<1x4x256xf32>
    %c0_44 = arith.constant 0 : index
    %c4 = arith.constant 4 : index
    %c0_45 = arith.constant 0 : index
    %80 = vector.load %arg12[%c0_44, %c4, %c0_45] : memref<1x8x256xf32, #tpu.memory_space<vmem>>, vector<1x4x256xf32>
    tpu.vector_store %arg12[%c0_44, %c4, %c0_45], %79 {strides = array<i32>} : memref<1x8x256xf32, #tpu.memory_space<vmem>>, vector<1x4x256xf32>,
    return
  }
  func.func @transform_0(%arg0: i32) -> (i32, i32, i32) {
    %c0_i32 = arith.constant 0 : i32
    %c0_i32_0 = arith.constant 0 : i32
    %c0_i32_1 = arith.constant 0 : i32
    return %arg0, %c0_i32, %c0_i32_0 : i32, i32, i32
  }
  func.func @transform_1(%arg0: i32) -> (i32, i32) {
    %c0_i32 = arith.constant 0 : i32
    %c0_i32_0 = arith.constant 0 : i32
    %c0_i32_1 = arith.constant 0 : i32
    return %c0_i32, %c0_i32_0 : i32, i32
  }
  func.func @transform_2(%arg0: i32) -> (i32, i32) {
    %c0_i32 = arith.constant 0 : i32
    %c0_i32_0 = arith.constant 0 : i32
    %c0_i32_1 = arith.constant 0 : i32
    return %c0_i32, %c0_i32_0 : i32, i32
  }
  func.func @transform_3(%arg0: i32) -> (i32, i32) {
    %c0_i32 = arith.constant 0 : i32
    %c0_i32_0 = arith.constant 0 : i32
    %c0_i32_1 = arith.constant 0 : i32
    return %c0_i32, %c0_i32_0 : i32, i32
  }
  func.func @transform_4(%arg0: i32) -> (i32, i32) {
    %c0_i32 = arith.constant 0 : i32
    %c0_i32_0 = arith.constant 0 : i32
    %c0_i32_1 = arith.constant 0 : i32
    return %c0_i32, %c0_i32_0 : i32, i32
  }
  func.func @transform_5(%arg0: i32) -> (i32, i32) {
    %c0_i32 = arith.constant 0 : i32
    %c0_i32_0 = arith.constant 0 : i32
    %c0_i32_1 = arith.constant 0 : i32
    return %c0_i32, %c0_i32_0 : i32, i32
  }
  func.func @transform_6(%arg0: i32) -> (i32, i32) {
    %c0_i32 = arith.constant 0 : i32
    %c0_i32_0 = arith.constant 0 : i32
    %c0_i32_1 = arith.constant 0 : i32
    return %c0_i32, %c0_i32_0 : i32, i32
  }
  func.func @transform_7(%arg0: i32) -> (i32, i32) {
    %c0_i32 = arith.constant 0 : i32
    %c0_i32_0 = arith.constant 0 : i32
    %c0_i32_1 = arith.constant 0 : i32
    return %c0_i32, %c0_i32_0 : i32, i32
  }
  func.func @transform_8(%arg0: i32) -> (i32, i32) {
    %c0_i32 = arith.constant 0 : i32
    %c0_i32_0 = arith.constant 0 : i32
    %c0_i32_1 = arith.constant 0 : i32
    return %c0_i32, %c0_i32_0 : i32, i32
  }
  func.func @transform_9(%arg0: i32) -> (i32, i32) {
    %c0_i32 = arith.constant 0 : i32
    %c0_i32_0 = arith.constant 0 : i32
    %c0_i32_1 = arith.constant 0 : i32
    return %c0_i32, %c0_i32_0 : i32, i32
  }
  func.func @transform_10(%arg0: i32) -> (i32, i32) {
    %c0_i32 = arith.constant 0 : i32
    %c0_i32_0 = arith.constant 0 : i32
    %c0_i32_1 = arith.constant 0 : i32
    return %c0_i32, %c0_i32_0 : i32, i32
  }
  func.func @transform_11(%arg0: i32) -> (i32, i32, i32) {
    %c0_i32 = arith.constant 0 : i32
    %c0_i32_0 = arith.constant 0 : i32
    %c0_i32_1 = arith.constant 0 : i32
    return %arg0, %c0_i32, %c0_i32_0 : i32, i32, i32
  }
}

</mosaic_0001>

<llo_original>
// kernel: cbam_forward.1
$region0: #{cbam_forward.1}
  #allocation0 [shape = 'u32[]', space=smem, size = 0x4, offset = 0x4, fixed_abs, tag = 'smem constant byte address 0x4 - core index']
  #allocation1 [shape = 'u32[144,128]{1,0:T(1,128)}', space=vmem, size = 0x12000, scoped, tag = 'internal scratch']
  #allocation2 [shape = 'f32[1,1]{1,0:T(1,128)S(6)}', space=smem, size = 0x200, scoped, tag = 'scoped memory for cbam_forward.1']
  %s0 = inlined_call_operand.vmem [shape: f32[2,4,256], index: 0, kind: input, shape index: {}]
  %s1 = inlined_call_operand.vmem [shape: f32[2,4], index: 1, kind: input, shape index: {}]
  %s2 = inlined_call_operand.vmem [shape: f32[1,2], index: 2, kind: input, shape index: {}]
  %s3 = inlined_call_operand.vmem [shape: f32[4,2], index: 3, kind: input, shape index: {}]
  %s4 = inlined_call_operand.vmem [shape: f32[1,4], index: 4, kind: input, shape index: {}]
  %s5 = inlined_call_operand.vmem [shape: f32[2,4], index: 5, kind: input, shape index: {}]
  %s6 = inlined_call_operand.vmem [shape: f32[1,2], index: 6, kind: input, shape index: {}]
  %s7 = inlined_call_operand.vmem [shape: f32[4,2], index: 7, kind: input, shape index: {}]
  %s8 = inlined_call_operand.vmem [shape: f32[1,4], index: 8, kind: input, shape index: {}]
  %s9 = inlined_call_operand.vmem [shape: f32[512,256], index: 9, kind: input, shape index: {}]
  %s10 = inlined_call_operand.<no memory space> [shape: f32[1,1], index: 10, kind: input, shape index: {}]
  %s11 = inlined_call_operand.vmem [shape: f32[2,8,256], index: 11, kind: output, shape index: {}]
  %s12 = sld [smem:[#allocation0]]
  $region77: #{cbam_forward.1} parent=0
    _
  %s14 = ssub.s32 1, %s12
  %s15 = scalar_select 0, %s14, %s12
  %16 = sst [smem:[#allocation2]] %s10
  loop: start=0, step=1, limit=4
  $region2: #{cbam_forward.1} parent=0 // loop_pre_header
    _
  $region3: #{cbam_forward.1} parent=0 // loop_header
    %s18 = sphi 0, %s22
    %p19 = scmp.ge.s32.totalorder %s18, 4
    %s28 = sphi 0, %s30
    %s31 = sphi 0, %s28
    %s32 = sphi 0, %s31
    %s48 = sphi 0, %s32
    %s52 = sphi 0, %s52
    %s54 = sphi 0, %s52
    %s55 = sphi 0, %s54
    %s69 = sphi 0, %s55
    %s73 = sphi 0, %s73
    %s75 = sphi 0, %s73
    %s76 = sphi 0, %s75
    %s90 = sphi 0, %s76
    %s94 = sphi 0, %s94
    %s96 = sphi 0, %s94
    %s97 = sphi 0, %s96
    %s111 = sphi 0, %s97
    %s115 = sphi 0, %s115
    %s117 = sphi 0, %s115
    %s118 = sphi 0, %s117
    %s132 = sphi 0, %s118
    %s136 = sphi 0, %s136
    %s138 = sphi 0, %s136
    %s139 = sphi 0, %s138
    %s153 = sphi 0, %s139
    %s157 = sphi 0, %s157
    %s159 = sphi 0, %s157
    %s160 = sphi 0, %s159
    %s174 = sphi 0, %s160
    %s178 = sphi 0, %s178
    %s180 = sphi 0, %s178
    %s181 = sphi 0, %s180
    %s195 = sphi 0, %s181
    %s199 = sphi 0, %s199
    %s201 = sphi 0, %s199
    %s202 = sphi 0, %s201
    %s216 = sphi 0, %s202
    %s220 = sphi 0, %s220
    %s222 = sphi 0, %s220
    %s223 = sphi 0, %s222
    %s237 = sphi 0, %s223
    %s241 = sphi 0, %s241
    %s243 = sphi 0, %s241
    %s244 = sphi 0, %s243
    %s258 = sphi 0, %s244
    %s264 = sphi 0, %s266
    %s267 = sphi 0, %s264
    %s268 = sphi 0, %s267
    %s284 = sphi 0, %s268
  $region4: #{cbam_forward.1} parent=0 // loop_header_branch
    %21 = sbr.rel (%p19) target = $region8
  $region5: #{cbam_forward.1} parent=0 // loop_body
    %s23 = ssub.s32 %s18, 1
    %s24 = ssub.s32 %s18, 2
    %s25 = sadd.s32 %s18, 1
    %s26 = ssub.s32 %s18, %s25
    %p27 = scmp.eq.s32.totalorder %s26, 0
    %s29 = sadd.s32 %s28, 1
    %s30 = scalar_select %p27, %s28, %s29
    %p33 = pneg %p27
    %p34 = scmp.eq.s32.totalorder %s18, 1
    %p35 = por %p33, %p34
    %p36 = scmp.ne.s32.totalorder %s28, %s31
    %p37 = scmp.eq.s32.totalorder %s18, 0
    %p38 = por %p36, %p37
    %p39 = scmp.ne.s32.totalorder %s28, %s31
    %p40 = scmp.eq.s32.totalorder %s23, 1
    %p41 = por %p39, %p40
    %p42 = scmp.ne.s32.totalorder %s31, %s32
    %p43 = scmp.eq.s32.totalorder %s23, 0
    %p44 = por %p42, %p43
    %p45 = scmp.ne.s32.totalorder %s31, %s32
    %p46 = scmp.eq.s32.totalorder %s24, 1
    %p47 = por %p45, %p46
    %p49 = scmp.ne.s32.totalorder %s32, %s48
    %p50 = scmp.eq.s32.totalorder %s24, 0
    %p51 = por %p49, %p50
    %s53 = sadd.s32 %s52, 1
    %p56 = scmp.eq.s32.totalorder %s18, 1
    %p57 = scmp.ne.s32.totalorder %s52, %s54
    %p58 = scmp.eq.s32.totalorder %s18, 0
    %p59 = por %p57, %p58
    %p60 = scmp.ne.s32.totalorder %s52, %s54
    %p61 = scmp.eq.s32.totalorder %s23, 1
    %p62 = por %p60, %p61
    %p63 = scmp.ne.s32.totalorder %s54, %s55
    %p64 = scmp.eq.s32.totalorder %s23, 0
    %p65 = por %p63, %p64
    %p66 = scmp.ne.s32.totalorder %s54, %s55
    %p67 = scmp.eq.s32.totalorder %s24, 1
    %p68 = por %p66, %p67
    %p70 = scmp.ne.s32.totalorder %s55, %s69
    %p71 = scmp.eq.s32.totalorder %s24, 0
    %p72 = por %p70, %p71
    %s74 = sadd.s32 %s73, 1
    %p77 = scmp.eq.s32.totalorder %s18, 1
    %p78 = scmp.ne.s32.totalorder %s73, %s75
    %p79 = scmp.eq.s32.totalorder %s18, 0
    %p80 = por %p78, %p79
    %p81 = scmp.ne.s32.totalorder %s73, %s75
    %p82 = scmp.eq.s32.totalorder %s23, 1
    %p83 = por %p81, %p82
    %p84 = scmp.ne.s32.totalorder %s75, %s76
    %p85 = scmp.eq.s32.totalorder %s23, 0
    %p86 = por %p84, %p85
    %p87 = scmp.ne.s32.totalorder %s75, %s76
    %p88 = scmp.eq.s32.totalorder %s24, 1
    %p89 = por %p87, %p88
    %p91 = scmp.ne.s32.totalorder %s76, %s90
    %p92 = scmp.eq.s32.totalorder %s24, 0
    %p93 = por %p91, %p92
    %s95 = sadd.s32 %s94, 1
    %p98 = scmp.eq.s32.totalorder %s18, 1
    %p99 = scmp.ne.s32.totalorder %s94, %s96
    %p100 = scmp.eq.s32.totalorder %s18, 0
    %p101 = por %p99, %p100
    %p102 = scmp.ne.s32.totalorder %s94, %s96
    %p103 = scmp.eq.s32.totalorder %s23, 1
    %p104 = por %p102, %p103
    %p105 = scmp.ne.s32.totalorder %s96, %s97
    %p106 = scmp.eq.s32.totalorder %s23, 0
    %p107 = por %p105, %p106
    %p108 = scmp.ne.s32.totalorder %s96, %s97
    %p109 = scmp.eq.s32.totalorder %s24, 1
    %p110 = por %p108, %p109
    %p112 = scmp.ne.s32.totalorder %s97, %s111
    %p113 = scmp.eq.s32.totalorder %s24, 0
    %p114 = por %p112, %p113
    %s116 = sadd.s32 %s115, 1
    %p119 = scmp.eq.s32.totalorder %s18, 1
    %p120 = scmp.ne.s32.totalorder %s115, %s117
    %p121 = scmp.eq.s32.totalorder %s18, 0
    %p122 = por %p120, %p121
    %p123 = scmp.ne.s32.totalorder %s115, %s117
    %p124 = scmp.eq.s32.totalorder %s23, 1
    %p125 = por %p123, %p124
    %p126 = scmp.ne.s32.totalorder %s117, %s118
    %p127 = scmp.eq.s32.totalorder %s23, 0
    %p128 = por %p126, %p127
    %p129 = scmp.ne.s32.totalorder %s117, %s118
    %p130 = scmp.eq.s32.totalorder %s24, 1
    %p131 = por %p129, %p130
    %p133 = scmp.ne.s32.totalorder %s118, %s132
    %p134 = scmp.eq.s32.totalorder %s24, 0
    %p135 = por %p133, %p134
    %s137 = sadd.s32 %s136, 1
    %p140 = scmp.eq.s32.totalorder %s18, 1
    %p141 = scmp.ne.s32.totalorder %s136, %s138
    %p142 = scmp.eq.s32.totalorder %s18, 0
    %p143 = por %p141, %p142
    %p144 = scmp.ne.s32.totalorder %s136, %s138
    %p145 = scmp.eq.s32.totalorder %s23, 1
    %p146 = por %p144, %p145
    %p147 = scmp.ne.s32.totalorder %s138, %s139
    %p148 = scmp.eq.s32.totalorder %s23, 0
    %p149 = por %p147, %p148
    %p150 = scmp.ne.s32.totalorder %s138, %s139
    %p151 = scmp.eq.s32.totalorder %s24, 1
    %p152 = por %p150, %p151
    %p154 = scmp.ne.s32.totalorder %s139, %s153
    %p155 = scmp.eq.s32.totalorder %s24, 0
    %p156 = por %p154, %p155
    %s158 = sadd.s32 %s157, 1
    %p161 = scmp.eq.s32.totalorder %s18, 1
    %p162 = scmp.ne.s32.totalorder %s157, %s159
    %p163 = scmp.eq.s32.totalorder %s18, 0
    %p164 = por %p162, %p163
    %p165 = scmp.ne.s32.totalorder %s157, %s159
    %p166 = scmp.eq.s32.totalorder %s23, 1
    %p167 = por %p165, %p166
    %p168 = scmp.ne.s32.totalorder %s159, %s160
    %p169 = scmp.eq.s32.totalorder %s23, 0
    %p170 = por %p168, %p169
    %p171 = scmp.ne.s32.totalorder %s159, %s160
    %p172 = scmp.eq.s32.totalorder %s24, 1
    %p173 = por %p171, %p172
    %p175 = scmp.ne.s32.totalorder %s160, %s174
    %p176 = scmp.eq.s32.totalorder %s24, 0
    %p177 = por %p175, %p176
    %s179 = sadd.s32 %s178, 1
    %p182 = scmp.eq.s32.totalorder %s18, 1
    %p183 = scmp.ne.s32.totalorder %s178, %s180
    %p184 = scmp.eq.s32.totalorder %s18, 0
    %p185 = por %p183, %p184
    %p186 = scmp.ne.s32.totalorder %s178, %s180
    %p187 = scmp.eq.s32.totalorder %s23, 1
    %p188 = por %p186, %p187
    %p189 = scmp.ne.s32.totalorder %s180, %s181
    %p190 = scmp.eq.s32.totalorder %s23, 0
    %p191 = por %p189, %p190
    %p192 = scmp.ne.s32.totalorder %s180, %s181
    %p193 = scmp.eq.s32.totalorder %s24, 1
    %p194 = por %p192, %p193
    %p196 = scmp.ne.s32.totalorder %s181, %s195
    %p197 = scmp.eq.s32.totalorder %s24, 0
    %p198 = por %p196, %p197
    %s200 = sadd.s32 %s199, 1
    %p203 = scmp.eq.s32.totalorder %s18, 1
    %p204 = scmp.ne.s32.totalorder %s199, %s201
    %p205 = scmp.eq.s32.totalorder %s18, 0
    %p206 = por %p204, %p205
    %p207 = scmp.ne.s32.totalorder %s199, %s201
    %p208 = scmp.eq.s32.totalorder %s23, 1
    %p209 = por %p207, %p208
    %p210 = scmp.ne.s32.totalorder %s201, %s202
    %p211 = scmp.eq.s32.totalorder %s23, 0
    %p212 = por %p210, %p211
    %p213 = scmp.ne.s32.totalorder %s201, %s202
    %p214 = scmp.eq.s32.totalorder %s24, 1
    %p215 = por %p213, %p214
    %p217 = scmp.ne.s32.totalorder %s202, %s216
    %p218 = scmp.eq.s32.totalorder %s24, 0
    %p219 = por %p217, %p218
    %s221 = sadd.s32 %s220, 1
    %p224 = scmp.eq.s32.totalorder %s18, 1
    %p225 = scmp.ne.s32.totalorder %s220, %s222
    %p226 = scmp.eq.s32.totalorder %s18, 0
    %p227 = por %p225, %p226
    %p228 = scmp.ne.s32.totalorder %s220, %s222
    %p229 = scmp.eq.s32.totalorder %s23, 1
    %p230 = por %p228, %p229
    %p231 = scmp.ne.s32.totalorder %s222, %s223
    %p232 = scmp.eq.s32.totalorder %s23, 0
    %p233 = por %p231, %p232
    %p234 = scmp.ne.s32.totalorder %s222, %s223
    %p235 = scmp.eq.s32.totalorder %s24, 1
    %p236 = por %p234, %p235
    %p238 = scmp.ne.s32.totalorder %s223, %s237
    %p239 = scmp.eq.s32.totalorder %s24, 0
    %p240 = por %p238, %p239
    %s242 = sadd.s32 %s241, 1
    %p245 = scmp.eq.s32.totalorder %s18, 1
    %p246 = scmp.ne.s32.totalorder %s241, %s243
    %p247 = scmp.eq.s32.totalorder %s18, 0
    %p248 = por %p246, %p247
    %p249 = scmp.ne.s32.totalorder %s241, %s243
    %p250 = scmp.eq.s32.totalorder %s23, 1
    %p251 = por %p249, %p250
    %p252 = scmp.ne.s32.totalorder %s243, %s244
    %p253 = scmp.eq.s32.totalorder %s23, 0
    %p254 = por %p252, %p253
    %p255 = scmp.ne.s32.totalorder %s243, %s244
    %p256 = scmp.eq.s32.totalorder %s24, 1
    %p257 = por %p255, %p256
    %p259 = scmp.ne.s32.totalorder %s244, %s258
    %p260 = scmp.eq.s32.totalorder %s24, 0
    %p261 = por %p259, %p260
    %s262 = ssub.s32 %s18, %s25
    %p263 = scmp.eq.s32.totalorder %s262, 0
    %s265 = sadd.s32 %s264, 1
    %s266 = scalar_select %p263, %s264, %s265
    %p269 = pneg %p263
    %p270 = scmp.eq.s32.totalorder %s18, 1
    %p271 = por %p269, %p270
    %p272 = scmp.ne.s32.totalorder %s264, %s267
    %p273 = scmp.eq.s32.totalorder %s18, 0
    %p274 = por %p272, %p273
    %p275 = scmp.ne.s32.totalorder %s264, %s267
    %p276 = scmp.eq.s32.totalorder %s23, 1
    %p277 = por %p275, %p276
    %p278 = scmp.ne.s32.totalorder %s267, %s268
    %p279 = scmp.eq.s32.totalorder %s23, 0
    %p280 = por %p278, %p279
    %p281 = scmp.ne.s32.totalorder %s267, %s268
    %p282 = scmp.eq.s32.totalorder %s24, 1
    %p283 = por %p281, %p282
    %p285 = scmp.ne.s32.totalorder %s268, %s284
    %p286 = scmp.eq.s32.totalorder %s24, 0
    %p287 = por %p285, %p286
    %p288 = scmp.le.s32.totalorder 1, %s18
    %p289 = scmp.lt.s32.totalorder %s18, 3
    %p290 = pnand %p288, %p289
    %p291 = pneg %p290
    // Predicated region
    $region9: #{cbam_forward.1} parent=5 // pred_check
      _
    $region10: #{cbam_forward.1} parent=5 // pred_check_branch
      %293 = sbr.rel (%p290) target = $region12
    $region11: #{cbam_forward.1} parent=5 // pred_region
      %s294 = ssub.s32 %s18, 1
      // Predicated region
      $region13: #{cbam_forward.1} parent=11 // pred_check
        %p295 = pneg %p65
      $region14: #{cbam_forward.1} parent=11 // pred_check_branch
        %297 = sbr.rel (%p295) target = $region16
      $region15: #{cbam_forward.1} parent=11 // pred_region
        _
      $region16: #{cbam_forward.1} parent=11 // pred_fallthru
        _
      // Predicated region
      $region17: #{cbam_forward.1} parent=11 // pred_check
        %p298 = pneg %p86
      $region18: #{cbam_forward.1} parent=11 // pred_check_branch
        %300 = sbr.rel (%p298) target = $region20
      $region19: #{cbam_forward.1} parent=11 // pred_region
        _
      $region20: #{cbam_forward.1} parent=11 // pred_fallthru
        _
      // Predicated region
      $region21: #{cbam_forward.1} parent=11 // pred_check
        %p301 = pneg %p107
      $region22: #{cbam_forward.1} parent=11 // pred_check_branch
        %303 = sbr.rel (%p301) target = $region24
      $region23: #{cbam_forward.1} parent=11 // pred_region
        _
      $region24: #{cbam_forward.1} parent=11 // pred_fallthru
        _
      // Predicated region
      $region25: #{cbam_forward.1} parent=11 // pred_check
        %p304 = pneg %p128
      $region26: #{cbam_forward.1} parent=11 // pred_check_branch
        %306 = sbr.rel (%p304) target = $region28
      $region27: #{cbam_forward.1} parent=11 // pred_region
        _
      $region28: #{cbam_forward.1} parent=11 // pred_fallthru
        _
      // Predicated region
      $region29: #{cbam_forward.1} parent=11 // pred_check
        %p307 = pneg %p149
      $region30: #{cbam_forward.1} parent=11 // pred_check_branch
        %309 = sbr.rel (%p307) target = $region32
      $region31: #{cbam_forward.1} parent=11 // pred_region
        _
      $region32: #{cbam_forward.1} parent=11 // pred_fallthru
        _
      // Predicated region
      $region33: #{cbam_forward.1} parent=11 // pred_check
        %p310 = pneg %p170
      $region34: #{cbam_forward.1} parent=11 // pred_check_branch
        %312 = sbr.rel (%p310) target = $region36
      $region35: #{cbam_forward.1} parent=11 // pred_region
        _
      $region36: #{cbam_forward.1} parent=11 // pred_fallthru
        _
      // Predicated region
      $region37: #{cbam_forward.1} parent=11 // pred_check
        %p313 = pneg %p191
      $region38: #{cbam_forward.1} parent=11 // pred_check_branch
        %315 = sbr.rel (%p313) target = $region40
      $region39: #{cbam_forward.1} parent=11 // pred_region
        _
      $region40: #{cbam_forward.1} parent=11 // pred_fallthru
        _
      // Predicated region
      $region41: #{cbam_forward.1} parent=11 // pred_check
        %p316 = pneg %p212
      $region42: #{cbam_forward.1} parent=11 // pred_check_branch
        %318 = sbr.rel (%p316) target = $region44
      $region43: #{cbam_forward.1} parent=11 // pred_region
        _
      $region44: #{cbam_forward.1} parent=11 // pred_fallthru
        _
      // Predicated region
      $region45: #{cbam_forward.1} parent=11 // pred_check
        %p319 = pneg %p233
      $region46: #{cbam_forward.1} parent=11 // pred_check_branch
        %321 = sbr.rel (%p319) target = $region48
      $region47: #{cbam_forward.1} parent=11 // pred_region
        _
      $region48: #{cbam_forward.1} parent=11 // pred_fallthru
        _
      // Predicated region
      $region49: #{cbam_forward.1} parent=11 // pred_check
        %p322 = pneg %p254
      $region50: #{cbam_forward.1} parent=11 // pred_check_branch
        %324 = sbr.rel (%p322) target = $region52
      $region51: #{cbam_forward.1} parent=11 // pred_region
        _
      $region52: #{cbam_forward.1} parent=11 // pred_fallthru
        _
    $region12: #{cbam_forward.1} parent=5 // pred_fallthru
      _
    %p325 = scmp.lt.s32.totalorder %s18, 2
    // Predicated region
    $region53: #{cbam_forward.1} parent=5 // pred_check
      %p326 = pneg %p325
    $region54: #{cbam_forward.1} parent=5 // pred_check_branch
      %328 = sbr.rel (%p326) target = $region56
    $region55: #{cbam_forward.1} parent=5 // pred_region
      // Predicated region
      $region57: #{cbam_forward.1} parent=55 // pred_check
        %p329 = pneg %p38
      $region58: #{cbam_forward.1} parent=55 // pred_check_branch
        %331 = sbr.rel (%p329) target = $region60
      $region59: #{cbam_forward.1} parent=55 // pred_region
        %p332 = scmp.lt.s32.totalorder %s18, 1
        %s333 = scalar_select %p332, %s18, 1
        %s334 = smul.addr %s333, 2
        %s335 = smul.addr %s334, 4
        %s336 = scalar_lea.vmem %s0, %s335
      $region60: #{cbam_forward.1} parent=55 // pred_fallthru
        _
    $region56: #{cbam_forward.1} parent=5 // pred_fallthru
      _
    %p337 = scmp.le.s32.totalorder 1, %s18
    %p338 = scmp.lt.s32.totalorder %s18, 3
    %p339 = pnand %p337, %p338
    %p340 = pneg %p339
    // Predicated region
    $region61: #{cbam_forward.1} parent=5 // pred_check
      _
    $region62: #{cbam_forward.1} parent=5 // pred_check_branch
      %342 = sbr.rel (%p339) target = $region64
    $region63: #{cbam_forward.1} parent=5 // pred_region
      %s343 = ssub.s32 %s18, 1
      %p344 = scmp.lt.s32.totalorder %s23, 1
      %s345 = scalar_select %p344, %s23, 1
      %s346 = smul.addr %s345, 2
      %s347 = smul.addr %s346, 4
      %s348 = scalar_lea.vmem %s0, %s347
      %p349 = pneg %p44
      %p350 = pneg %p41
      %p351 = pneg %p65
      %p352 = pneg %p62
      %p353 = pneg %p86
      %p354 = pneg %p83
      %p355 = pneg %p107
      %p356 = pneg %p104
      %p357 = pneg %p128
      %p358 = pneg %p125
      %p359 = pneg %p149
      %p360 = pneg %p146
      %p361 = pneg %p170
      %p362 = pneg %p167
      %p363 = pneg %p191
      %p364 = pneg %p188
      %p365 = pneg %p212
      %p366 = pneg %p209
      %p367 = pneg %p233
      %p368 = pneg %p230
      %p369 = pneg %p254
      %p370 = pneg %p251
      %p371 = pneg %p280
      %p372 = pneg %p277
      %p373 = scmp.lt.s32.totalorder %s23, 1
      %s374 = scalar_select %p373, %s23, 1
      %s375 = smul.addr %s374, 2
      %s376 = smul.addr %s375, 8
      %s377 = scalar_lea.vmem %s11, %s376
      %p378 = scmp.lt.s32.totalorder %s23, 1
      %s379 = scalar_select %p378, %s23, 1
      %s380 = smul.addr %s379, 2
      %s381 = smul.addr %s380, 4
      %s382 = scalar_lea.vmem %s0, %s381
      %p383 = scmp.lt.s32.totalorder %s23, 1
      %s384 = scalar_select %p383, %s23, 1
      %s385 = smul.addr %s384, 2
      %s386 = smul.addr %s385, 8
      %s387 = scalar_lea.vmem %s11, %s386
      %v388 = vld [vmem:[%s382] sm:$0xff]
      %v390 = vcombine.high %v388, %v388
      %vm392 = vcmask 1043456
      %v393 = vsel %vm392, %v388, -inf
      %v394 = vsel %vm392, %v390, -inf
      %v395 = vmax.f32 %v393, %v394
      %396 = vmax.xlane.f32.xlu0 %v395
      %v397 = vpop.xlane.xlu0 %396
      %v398 = vsel %vm392, %v388, 0.0
      %v399 = vsel %vm392, %v390, 0.0
      %v400 = vadd.f32 %v398, %v399
      %401 = vadd.xlane.f32.xlu0 %v400
      %v402 = vpop.xlane.xlu0 %401
      %v403 = vmul.f32 %v402, 0.00390625
      %v404 = vld [vmem:[%s1] sm:$0x3]
      %v406 = vlaneseq
      %v407 = vshrl.u32 %v406, 7
      %v408 = vsub.s32 0, %v407
      %v409 = vrot.slane %v404, %v408
      %411 = vbcast.lane.b32.xlu0 %v409, 256
      %v412 = vpop.permute.xlu0 %411
      %v413 = vlaneseq
      %v414 = vshrl.u32 %v413, 7
      %v415 = vsub.s32 1, %v414
      %v416 = vrot.slane %v404, %v415
      %418 = vbcast.lane.b32.xlu0 %v416, 256
      %v419 = vpop.permute.xlu0 %418
      %v422 = vmul.f32 %v397, %v412
      %v423 = vmul.f32 %v397, %v419
      %426 = vset.pattern.permute.xlu0 0
      %427 = vperm.xlu0 %426, %v422
      %v428 = vpop.permute.xlu0 %427
      %429 = vset.pattern.permute.xlu0 0
      %430 = vperm.xlu0 %429, %v423
      %v431 = vpop.permute.xlu0 %430
      %v432 = vlaneseq
      %v433 = vand.u32 %v432, 127
      %v434 = vlaneseq
      %v435 = vshrl.u32 %v434, 7
      %v436 = vsub.s32 %v433, %v435
      %v437 = vrot.slane %v428, %v436
      %v438 = vlaneseq
      %v439 = vshrl.u32 %v438, 7
      %v440 = vsub.s32 %v433, %v439
      %v441 = vrot.slane %v431, %v440
      %vm442 = vcmask 1041409
      %v443 = vsel %vm442, %v441, %v437
      %vm445 = vcmask 25600
      %v446 = vsel %vm445, %v443, 0.0
      %447 = vadd.xlane.f32.xlu0 %v446
      %v448 = vpop.xlane.xlu0 %447
      %v449 = vld [vmem:[%s2] sm:$0x1]
      %v451 = vlaneseq
      %v452 = vshrl.u32 %v451, 7
      %v453 = vsub.s32 0, %v452
      %v454 = vrot.slane %v449, %v453
      %456 = vbcast.lane.b32.xlu0 %v454, 256
      %v457 = vpop.permute.xlu0 %456
      %v459 = vadd.f32 %v448, %v457
      %v460 = vmax.f32 %v459, 0.0
      %v461 = vld [vmem:[%s3] sm:$0xf]
      %v463 = vlaneseq
      %v464 = vshrl.u32 %v463, 7
      %v465 = vsub.s32 0, %v464
      %v466 = vrot.slane %v461, %v465
      %468 = vbcast.lane.b32.xlu0 %v466, 256
      %v469 = vpop.permute.xlu0 %468
      %v470 = vlaneseq
      %v471 = vshrl.u32 %v470, 7
      %v472 = vsub.s32 1, %v471
      %v473 = vrot.slane %v461, %v472
      %475 = vbcast.lane.b32.xlu0 %v473, 256
      %v476 = vpop.permute.xlu0 %475
      %v477 = vlaneseq
      %v478 = vshrl.u32 %v477, 7
      %v479 = vsub.s32 2, %v478
      %v480 = vrot.slane %v461, %v479
      %482 = vbcast.lane.b32.xlu0 %v480, 256
      %v483 = vpop.permute.xlu0 %482
      %v484 = vlaneseq
      %v485 = vshrl.u32 %v484, 7
      %v486 = vsub.s32 3, %v485
      %v487 = vrot.slane %v461, %v486
      %489 = vbcast.lane.b32.xlu0 %v487, 256
      %v490 = vpop.permute.xlu0 %489
      %v495 = vmul.f32 %v460, %v469
      %v496 = vmul.f32 %v460, %v476
      %v497 = vmul.f32 %v460, %v483
      %v498 = vmul.f32 %v460, %v490
      %503 = vset.pattern.permute.xlu0 0
      %504 = vperm.xlu0 %503, %v495
      %v505 = vpop.permute.xlu0 %504
      %506 = vset.pattern.permute.xlu0 0
      %507 = vperm.xlu0 %506, %v496
      %v508 = vpop.permute.xlu0 %507
      %509 = vset.pattern.permute.xlu0 0
      %510 = vperm.xlu0 %509, %v497
      %v511 = vpop.permute.xlu0 %510
      %512 = vset.pattern.permute.xlu0 0
      %513 = vperm.xlu0 %512, %v498
      %v514 = vpop.permute.xlu0 %513
      %v515 = vlaneseq
      %v516 = vshrl.u32 %v515, 7
      %v517 = vsub.s32 %v433, %v516
      %v518 = vrot.slane %v505, %v517
      %v519 = vlaneseq
      %v520 = vshrl.u32 %v519, 7
      %v521 = vsub.s32 %v433, %v520
      %v522 = vrot.slane %v508, %v521
      %v523 = vlaneseq
      %v524 = vshrl.u32 %v523, 7
      %v525 = vsub.s32 %v433, %v524
      %v526 = vrot.slane %v511, %v525
      %v527 = vlaneseq
      %v528 = vshrl.u32 %v527, 7
      %v529 = vsub.s32 %v433, %v528
      %v530 = vrot.slane %v514, %v529
      %v531 = vsel %vm442, %v522, %v518
      %vm532 = vcmask 1042434
      %v533 = vsel %vm532, %v526, %v531
      %vm534 = vcmask 1043459
      %v535 = vsel %vm534, %v530, %v533
      %vm537 = vcmask 11264
      %v538 = vsel %vm537, %v535, 0.0
      %539 = vadd.xlane.f32.xlu0 %v538
      %v540 = vpop.xlane.xlu0 %539
      %v541 = vld [vmem:[%s4] sm:$0x1]
      %v543 = vlaneseq
      %v544 = vshrl.u32 %v543, 7
      %v545 = vsub.s32 0, %v544
      %v546 = vrot.slane %v541, %v545
      %548 = vbcast.lane.b32.xlu0 %v546, 256
      %v549 = vpop.permute.xlu0 %548
      %v551 = vadd.f32 %v540, %v549
      %v552 = vxor.u32 %v551, 2147483648
      %v553 = vmul.f32 %v552, 1.442695
      %v554 = vpow.pop %v553
      %v555 = vadd.f32 %v554, 1.0
      %v556 = vrcp.pop %v555
      %v557 = vmul.f32 1.0, %v556
      %v558 = vld [vmem:[%s5] sm:$0x3]
      %v560 = vlaneseq
      %v561 = vshrl.u32 %v560, 7
      %v562 = vsub.s32 0, %v561
      %v563 = vrot.slane %v558, %v562
      %565 = vbcast.lane.b32.xlu0 %v563, 256
      %v566 = vpop.permute.xlu0 %565
      %v567 = vlaneseq
      %v568 = vshrl.u32 %v567, 7
      %v569 = vsub.s32 1, %v568
      %v570 = vrot.slane %v558, %v569
      %572 = vbcast.lane.b32.xlu0 %v570, 256
      %v573 = vpop.permute.xlu0 %572
      %v576 = vmul.f32 %v403, %v566
      %v577 = vmul.f32 %v403, %v573
      %580 = vset.pattern.permute.xlu0 0
      %581 = vperm.xlu0 %580, %v576
      %v582 = vpop.permute.xlu0 %581
      %583 = vset.pattern.permute.xlu0 0
      %584 = vperm.xlu0 %583, %v577
      %v585 = vpop.permute.xlu0 %584
      %v586 = vlaneseq
      %v587 = vshrl.u32 %v586, 7
      %v588 = vsub.s32 %v433, %v587
      %v589 = vrot.slane %v582, %v588
      %v590 = vlaneseq
      %v591 = vshrl.u32 %v590, 7
      %v592 = vsub.s32 %v433, %v591
      %v593 = vrot.slane %v585, %v592
      %v594 = vsel %vm442, %v593, %v589
      %v596 = vsel %vm445, %v594, 0.0
      %597 = vadd.xlane.f32.xlu0 %v596
      %v598 = vpop.xlane.xlu0 %597
      %v599 = vld [vmem:[%s6] sm:$0x1]
      %v601 = vlaneseq
      %v602 = vshrl.u32 %v601, 7
      %v603 = vsub.s32 0, %v602
      %v604 = vrot.slane %v599, %v603
      %606 = vbcast.lane.b32.xlu0 %v604, 256
      %v607 = vpop.permute.xlu0 %606
      %v609 = vadd.f32 %v598, %v607
      %v610 = vmax.f32 %v609, 0.0
      %v611 = vld [vmem:[%s7] sm:$0xf]
      %v613 = vlaneseq
      %v614 = vshrl.u32 %v613, 7
      %v615 = vsub.s32 0, %v614
      %v616 = vrot.slane %v611, %v615
      %618 = vbcast.lane.b32.xlu0 %v616, 256
      %v619 = vpop.permute.xlu0 %618
      %v620 = vlaneseq
      %v621 = vshrl.u32 %v620, 7
      %v622 = vsub.s32 1, %v621
      %v623 = vrot.slane %v611, %v622
      %625 = vbcast.lane.b32.xlu0 %v623, 256
      %v626 = vpop.permute.xlu0 %625
      %v627 = vlaneseq
      %v628 = vshrl.u32 %v627, 7
      %v629 = vsub.s32 2, %v628
      %v630 = vrot.slane %v611, %v629
      %632 = vbcast.lane.b32.xlu0 %v630, 256
      %v633 = vpop.permute.xlu0 %632
      %v634 = vlaneseq
      %v635 = vshrl.u32 %v634, 7
      %v636 = vsub.s32 3, %v635
      %v637 = vrot.slane %v611, %v636
      %639 = vbcast.lane.b32.xlu0 %v637, 256
      %v640 = vpop.permute.xlu0 %639
      %v645 = vmul.f32 %v610, %v619
      %v646 = vmul.f32 %v610, %v626
      %v647 = vmul.f32 %v610, %v633
      %v648 = vmul.f32 %v610, %v640
      %653 = vset.pattern.permute.xlu0 0
      %654 = vperm.xlu0 %653, %v645
      %v655 = vpop.permute.xlu0 %654
      %656 = vset.pattern.permute.xlu0 0
      %657 = vperm.xlu0 %656, %v646
      %v658 = vpop.permute.xlu0 %657
      %659 = vset.pattern.permute.xlu0 0
      %660 = vperm.xlu0 %659, %v647
      %v661 = vpop.permute.xlu0 %660
      %662 = vset.pattern.permute.xlu0 0
      %663 = vperm.xlu0 %662, %v648
      %v664 = vpop.permute.xlu0 %663
      %v665 = vlaneseq
      %v666 = vshrl.u32 %v665, 7
      %v667 = vsub.s32 %v433, %v666
      %v668 = vrot.slane %v655, %v667
      %v669 = vlaneseq
      %v670 = vshrl.u32 %v669, 7
      %v671 = vsub.s32 %v433, %v670
      %v672 = vrot.slane %v658, %v671
      %v673 = vlaneseq
      %v674 = vshrl.u32 %v673, 7
      %v675 = vsub.s32 %v433, %v674
      %v676 = vrot.slane %v661, %v675
      %v677 = vlaneseq
      %v678 = vshrl.u32 %v677, 7
      %v679 = vsub.s32 %v433, %v678
      %v680 = vrot.slane %v664, %v679
      %v681 = vsel %vm442, %v672, %v668
      %v682 = vsel %vm532, %v676, %v681
      %v683 = vsel %vm534, %v680, %v682
      %v685 = vsel %vm537, %v683, 0.0
      %686 = vadd.xlane.f32.xlu0 %v685
      %v687 = vpop.xlane.xlu0 %686
      %v688 = vld [vmem:[%s8] sm:$0x1]
      %v690 = vlaneseq
      %v691 = vshrl.u32 %v690, 7
      %v692 = vsub.s32 0, %v691
      %v693 = vrot.slane %v688, %v692
      %695 = vbcast.lane.b32.xlu0 %v693, 256
      %v696 = vpop.permute.xlu0 %695
      %v698 = vadd.f32 %v687, %v696
      %v699 = vxor.u32 %v698, 2147483648
      %v700 = vmul.f32 %v699, 1.442695
      %v701 = vpow.pop %v700
      %v702 = vadd.f32 %v701, 1.0
      %v703 = vrcp.pop %v702
      %v704 = vmul.f32 1.0, %v703
      %v705 = vadd.f32 %v557, %v704
      %v706 = vxor.u32 %v705, 2147483648
      %v707 = vmul.f32 %v706, 1.442695
      %v708 = vpow.pop %v707
      %v709 = vadd.f32 %v708, 1.0
      %v710 = vrcp.pop %v709
      %v711 = vmul.f32 1.0, %v710
      %713 = vset.pattern.permute.xlu0 0
      %714 = vperm.xlu0 %713, %v711
      %v715 = vpop.permute.xlu0 %714
      %v717 = vmul.f32 %v715, %v388
      %v718 = vmul.f32 %v715, %v390
      %v719 = vsel %vm392, %v717, -inf
      %v720 = vrot.slane %v719, 4
      %v721 = vmax.f32 %v719, %v720
      %v722 = vrot.slane %v721, 2
      %v723 = vmax.f32 %v721, %v722
      %v724 = vrot.slane %v723, 1
      %v725 = vmax.f32 %v723, %v724
      %v726 = vsel %vm392, %v718, -inf
      %v727 = vrot.slane %v726, 4
      %v728 = vmax.f32 %v726, %v727
      %v729 = vrot.slane %v728, 2
      %v730 = vmax.f32 %v728, %v729
      %v731 = vrot.slane %v730, 1
      %v732 = vmax.f32 %v730, %v731
      %v733 = vsel %vm392, %v717, 0.0
      %v734 = vrot.slane %v733, 4
      %v735 = vadd.f32 %v733, %v734
      %v736 = vrot.slane %v735, 2
      %v737 = vadd.f32 %v735, %v736
      %v738 = vrot.slane %v737, 1
      %v739 = vadd.f32 %v737, %v738
      %v740 = vsel %vm392, %v718, 0.0
      %v741 = vrot.slane %v740, 4
      %v742 = vadd.f32 %v740, %v741
      %v743 = vrot.slane %v742, 2
      %v744 = vadd.f32 %v742, %v743
      %v745 = vrot.slane %v744, 1
      %v746 = vadd.f32 %v744, %v745
      %v747 = vmul.f32 %v739, 0.25
      %v748 = vmul.f32 %v746, 0.25
      %v749 = vld [vmem:[%s9] sm:$0xff]
      %v750 = vld [vmem:[%s9 + $0x8] sm:$0xff]
      %v751 = vld [vmem:[%s9 + $0x10] sm:$0xff]
      %v752 = vld [vmem:[%s9 + $0x18] sm:$0xff]
      %v753 = vld [vmem:[%s9 + $0x20] sm:$0xff]
      %v754 = vld [vmem:[%s9 + $0x28] sm:$0xff]
      %v755 = vld [vmem:[%s9 + $0x30] sm:$0xff]
      %v756 = vld [vmem:[%s9 + $0x38] sm:$0xff]
      %v757 = vld [vmem:[%s9 + $0x40] sm:$0xff]
      %v758 = vld [vmem:[%s9 + $0x48] sm:$0xff]
      %v759 = vld [vmem:[%s9 + $0x50] sm:$0xff]
      %v760 = vld [vmem:[%s9 + $0x58] sm:$0xff]
      %v761 = vld [vmem:[%s9 + $0x60] sm:$0xff]
      %v762 = vld [vmem:[%s9 + $0x68] sm:$0xff]
      %v763 = vld [vmem:[%s9 + $0x70] sm:$0xff]
      %v764 = vld [vmem:[%s9 + $0x78] sm:$0xff]
      %v765 = vld [vmem:[%s9 + $0x80] sm:$0xff]
      %v766 = vld [vmem:[%s9 + $0x88] sm:$0xff]
      %v767 = vld [vmem:[%s9 + $0x90] sm:$0xff]
      %v768 = vld [vmem:[%s9 + $0x98] sm:$0xff]
      %v769 = vld [vmem:[%s9 + $0xa0] sm:$0xff]
      %v770 = vld [vmem:[%s9 + $0xa8] sm:$0xff]
      %v771 = vld [vmem:[%s9 + $0xb0] sm:$0xff]
      %v772 = vld [vmem:[%s9 + $0xb8] sm:$0xff]
      %v773 = vld [vmem:[%s9 + $0xc0] sm:$0xff]
      %v774 = vld [vmem:[%s9 + $0xc8] sm:$0xff]
      %v775 = vld [vmem:[%s9 + $0xd0] sm:$0xff]
      %v776 = vld [vmem:[%s9 + $0xd8] sm:$0xff]
      %v777 = vld [vmem:[%s9 + $0xe0] sm:$0xff]
      %v778 = vld [vmem:[%s9 + $0xe8] sm:$0xff]
      %v779 = vld [vmem:[%s9 + $0xf0] sm:$0xff]
      %v780 = vld [vmem:[%s9 + $0xf8] sm:$0xff]
      %v781 = vld [vmem:[%s9 + $0x100] sm:$0xff]
      %v782 = vld [vmem:[%s9 + $0x108] sm:$0xff]
      %v783 = vld [vmem:[%s9 + $0x110] sm:$0xff]
      %v784 = vld [vmem:[%s9 + $0x118] sm:$0xff]
      %v785 = vld [vmem:[%s9 + $0x120] sm:$0xff]
      %v786 = vld [vmem:[%s9 + $0x128] sm:$0xff]
      %v787 = vld [vmem:[%s9 + $0x130] sm:$0xff]
      %v788 = vld [vmem:[%s9 + $0x138] sm:$0xff]
      %v789 = vld [vmem:[%s9 + $0x140] sm:$0xff]
      %v790 = vld [vmem:[%s9 + $0x148] sm:$0xff]
      %v791 = vld [vmem:[%s9 + $0x150] sm:$0xff]
      %v792 = vld [vmem:[%s9 + $0x158] sm:$0xff]
      %v793 = vld [vmem:[%s9 + $0x160] sm:$0xff]
      %v794 = vld [vmem:[%s9 + $0x168] sm:$0xff]
      %v795 = vld [vmem:[%s9 + $0x170] sm:$0xff]
      %v796 = vld [vmem:[%s9 + $0x178] sm:$0xff]
      %v797 = vld [vmem:[%s9 + $0x180] sm:$0xff]
      %v798 = vld [vmem:[%s9 + $0x188] sm:$0xff]
      %v799 = vld [vmem:[%s9 + $0x190] sm:$0xff]
      %v800 = vld [vmem:[%s9 + $0x198] sm:$0xff]
      %v801 = vld [vmem:[%s9 + $0x1a0] sm:$0xff]
      %v802 = vld [vmem:[%s9 + $0x1a8] sm:$0xff]
      %v803 = vld [vmem:[%s9 + $0x1b0] sm:$0xff]
      %v804 = vld [vmem:[%s9 + $0x1b8] sm:$0xff]
      %v805 = vld [vmem:[%s9 + $0x1c0] sm:$0xff]
      %v806 = vld [vmem:[%s9 + $0x1c8] sm:$0xff]
      %v807 = vld [vmem:[%s9 + $0x1d0] sm:$0xff]
      %v808 = vld [vmem:[%s9 + $0x1d8] sm:$0xff]
      %v809 = vld [vmem:[%s9 + $0x1e0] sm:$0xff]
      %v810 = vld [vmem:[%s9 + $0x1e8] sm:$0xff]
      %v811 = vld [vmem:[%s9 + $0x1f0] sm:$0xff]
      %v812 = vld [vmem:[%s9 + $0x1f8] sm:$0xff]
      %v813 = vld [vmem:[%s9 + $0x200] sm:$0xff]
      %v814 = vld [vmem:[%s9 + $0x208] sm:$0xff]
      %v815 = vld [vmem:[%s9 + $0x210] sm:$0xff]
      %v816 = vld [vmem:[%s9 + $0x218] sm:$0xff]
      %v817 = vld [vmem:[%s9 + $0x220] sm:$0xff]
      %v818 = vld [vmem:[%s9 + $0x228] sm:$0xff]
      %v819 = vld [vmem:[%s9 + $0x230] sm:$0xff]
      %v820 = vld [vmem:[%s9 + $0x238] sm:$0xff]
      %v821 = vld [vmem:[%s9 + $0x240] sm:$0xff]
      %v822 = vld [vmem:[%s9 + $0x248] sm:$0xff]
      %v823 = vld [vmem:[%s9 + $0x250] sm:$0xff]
      %v824 = vld [vmem:[%s9 + $0x258] sm:$0xff]
      %v825 = vld [vmem:[%s9 + $0x260] sm:$0xff]
      %v826 = vld [vmem:[%s9 + $0x268] sm:$0xff]
      %v827 = vld [vmem:[%s9 + $0x270] sm:$0xff]
      %v828 = vld [vmem:[%s9 + $0x278] sm:$0xff]
      %v829 = vld [vmem:[%s9 + $0x280] sm:$0xff]
      %v830 = vld [vmem:[%s9 + $0x288] sm:$0xff]
      %v831 = vld [vmem:[%s9 + $0x290] sm:$0xff]
      %v832 = vld [vmem:[%s9 + $0x298] sm:$0xff]
      %v833 = vld [vmem:[%s9 + $0x2a0] sm:$0xff]
      %v834 = vld [vmem:[%s9 + $0x2a8] sm:$0xff]
      %v835 = vld [vmem:[%s9 + $0x2b0] sm:$0xff]
      %v836 = vld [vmem:[%s9 + $0x2b8] sm:$0xff]
      %v837 = vld [vmem:[%s9 + $0x2c0] sm:$0xff]
      %v838 = vld [vmem:[%s9 + $0x2c8] sm:$0xff]
      %v839 = vld [vmem:[%s9 + $0x2d0] sm:$0xff]
      %v840 = vld [vmem:[%s9 + $0x2d8] sm:$0xff]
      %v841 = vld [vmem:[%s9 + $0x2e0] sm:$0xff]
      %v842 = vld [vmem:[%s9 + $0x2e8] sm:$0xff]
      %v843 = vld [vmem:[%s9 + $0x2f0] sm:$0xff]
      %v844 = vld [vmem:[%s9 + $0x2f8] sm:$0xff]
      %v845 = vld [vmem:[%s9 + $0x300] sm:$0xff]
      %v846 = vld [vmem:[%s9 + $0x308] sm:$0xff]
      %v847 = vld [vmem:[%s9 + $0x310] sm:$0xff]
      %v848 = vld [vmem:[%s9 + $0x318] sm:$0xff]
      %v849 = vld [vmem:[%s9 + $0x320] sm:$0xff]
      %v850 = vld [vmem:[%s9 + $0x328] sm:$0xff]
      %v851 = vld [vmem:[%s9 + $0x330] sm:$0xff]
      %v852 = vld [vmem:[%s9 + $0x338] sm:$0xff]
      %v853 = vld [vmem:[%s9 + $0x340] sm:$0xff]
      %v854 = vld [vmem:[%s9 + $0x348] sm:$0xff]
      %v855 = vld [vmem:[%s9 + $0x350] sm:$0xff]
      %v856 = vld [vmem:[%s9 + $0x358] sm:$0xff]
      %v857 = vld [vmem:[%s9 + $0x360] sm:$0xff]
      %v858 = vld [vmem:[%s9 + $0x368] sm:$0xff]
      %v859 = vld [vmem:[%s9 + $0x370] sm:$0xff]
      %v860 = vld [vmem:[%s9 + $0x378] sm:$0xff]
      %v861 = vld [vmem:[%s9 + $0x380] sm:$0xff]
      %v862 = vld [vmem:[%s9 + $0x388] sm:$0xff]
      %v863 = vld [vmem:[%s9 + $0x390] sm:$0xff]
      %v864 = vld [vmem:[%s9 + $0x398] sm:$0xff]
      %v865 = vld [vmem:[%s9 + $0x3a0] sm:$0xff]
      %v866 = vld [vmem:[%s9 + $0x3a8] sm:$0xff]
      %v867 = vld [vmem:[%s9 + $0x3b0] sm:$0xff]
      %v868 = vld [vmem:[%s9 + $0x3b8] sm:$0xff]
      %v869 = vld [vmem:[%s9 + $0x3c0] sm:$0xff]
      %v870 = vld [vmem:[%s9 + $0x3c8] sm:$0xff]
      %v871 = vld [vmem:[%s9 + $0x3d0] sm:$0xff]
      %v872 = vld [vmem:[%s9 + $0x3d8] sm:$0xff]
      %v873 = vld [vmem:[%s9 + $0x3e0] sm:$0xff]
      %v874 = vld [vmem:[%s9 + $0x3e8] sm:$0xff]
      %v875 = vld [vmem:[%s9 + $0x3f0] sm:$0xff]
      %v876 = vld [vmem:[%s9 + $0x3f8] sm:$0xff]
      %s877 = sld [smem:[#allocation2]]
      %v878 = vstv %s877
      %879 = vmatprep.subr.mxu0 %v780
      %880 = vmatpush1.msra.mxu0 %v779
      %881 = vmatprep.subr.mxu0 %v778
      %882 = vmatpush1.msra.mxu0 %v777
      %883 = vmatprep.subr.mxu0 %v776
      %884 = vmatpush1.msra.mxu0 %v775
      %885 = vmatprep.subr.mxu0 %v774
      %886 = vmatpush1.msra.mxu0 %v773
      %887 = vmatprep.subr.mxu0 %v772
      %888 = vmatpush1.msra.mxu0 %v771
      %889 = vmatprep.subr.mxu0 %v770
      %890 = vmatpush1.msra.mxu0 %v769
      %891 = vmatprep.subr.mxu0 %v768
      %892 = vmatpush1.msra.mxu0 %v767
      %893 = vmatprep.subr.mxu0 %v766
      %894 = vmatpush1.msra.mxu0 %v765
      %895 = vmatprep.subr.mxu0 %v764
      %896 = vmatpush1.msra.mxu0 %v763
      %897 = vmatprep.subr.mxu0 %v762
      %898 = vmatpush1.msra.mxu0 %v761
      %899 = vmatprep.subr.mxu0 %v760
      %900 = vmatpush1.msra.mxu0 %v759
      %901 = vmatprep.subr.mxu0 %v758
      %902 = vmatpush1.msra.mxu0 %v757
      %903 = vmatprep.subr.mxu0 %v756
      %904 = vmatpush1.msra.mxu0 %v755
      %905 = vmatprep.subr.mxu0 %v754
      %906 = vmatpush1.msra.mxu0 %v753
      %907 = vmatprep.subr.mxu0 %v752
      %908 = vmatpush1.msra.mxu0 %v751
      %909 = vmatprep.subr.mxu0 %v750
      %910 = vmatpush1.msra.mxu0 %v749
      %911 = vmatprep.subr.mxu0 %v812
      %912 = vmatpush2.msra.mxu0 %v811
      %913 = vmatprep.subr.mxu0 %v810
      %914 = vmatpush2.msra.mxu0 %v809
      %915 = vmatprep.subr.mxu0 %v808
      %916 = vmatpush2.msra.mxu0 %v807
      %917 = vmatprep.subr.mxu0 %v806
      %918 = vmatpush2.msra.mxu0 %v805
      %919 = vmatprep.subr.mxu0 %v804
      %920 = vmatpush2.msra.mxu0 %v803
      %921 = vmatprep.subr.mxu0 %v802
      %922 = vmatpush2.msra.mxu0 %v801
      %923 = vmatprep.subr.mxu0 %v800
      %924 = vmatpush2.msra.mxu0 %v799
      %925 = vmatprep.subr.mxu0 %v798
      %926 = vmatpush2.msra.mxu0 %v797
      %927 = vmatprep.subr.mxu0 %v796
      %928 = vmatpush2.msra.mxu0 %v795
      %929 = vmatprep.subr.mxu0 %v794
      %930 = vmatpush2.msra.mxu0 %v793
      %931 = vmatprep.subr.mxu0 %v792
      %932 = vmatpush2.msra.mxu0 %v791
      %933 = vmatprep.subr.mxu0 %v790
      %934 = vmatpush2.msra.mxu0 %v789
      %935 = vmatprep.subr.mxu0 %v788
      %936 = vmatpush2.msra.mxu0 %v787
      %937 = vmatprep.subr.mxu0 %v786
      %938 = vmatpush2.msra.mxu0 %v785
      %939 = vmatprep.subr.mxu0 %v784
      %940 = vmatpush2.msra.mxu0 %v783
      %941 = vmatprep.subr.mxu0 %v782
      %942 = vmatpush2.msra.mxu0 %v781
      %943 = vmatprep.mubr.f32.mxu0 %v732
      %944 = vmatmul.mubr.f32.gmra.mxu0 %v725
      %v945 = vpop.f32.mrf.mxu0
      %v946 = vadd.f32 %v878, %v945
      %v947 = vpop.f32.mrf.mxu0
      %v948 = vadd.f32 %v878, %v947
      %949 = vdwg.mxu0
      %950 = vmatprep.subr.mxu0 %v844
      %951 = vmatpush1.msra.mxu0 %v843
      %952 = vmatprep.subr.mxu0 %v842
      %953 = vmatpush1.msra.mxu0 %v841
      %954 = vmatprep.subr.mxu0 %v840
      %955 = vmatpush1.msra.mxu0 %v839
      %956 = vmatprep.subr.mxu0 %v838
      %957 = vmatpush1.msra.mxu0 %v837
      %958 = vmatprep.subr.mxu0 %v836
      %959 = vmatpush1.msra.mxu0 %v835
      %960 = vmatprep.subr.mxu0 %v834
      %961 = vmatpush1.msra.mxu0 %v833
      %962 = vmatprep.subr.mxu0 %v832
      %963 = vmatpush1.msra.mxu0 %v831
      %964 = vmatprep.subr.mxu0 %v830
      %965 = vmatpush1.msra.mxu0 %v829
      %966 = vmatprep.subr.mxu0 %v828
      %967 = vmatpush1.msra.mxu0 %v827
      %968 = vmatprep.subr.mxu0 %v826
      %969 = vmatpush1.msra.mxu0 %v825
      %970 = vmatprep.subr.mxu0 %v824
      %971 = vmatpush1.msra.mxu0 %v823
      %972 = vmatprep.subr.mxu0 %v822
      %973 = vmatpush1.msra.mxu0 %v821
      %974 = vmatprep.subr.mxu0 %v820
      %975 = vmatpush1.msra.mxu0 %v819
      %976 = vmatprep.subr.mxu0 %v818
      %977 = vmatpush1.msra.mxu0 %v817
      %978 = vmatprep.subr.mxu0 %v816
      %979 = vmatpush1.msra.mxu0 %v815
      %980 = vmatprep.subr.mxu0 %v814
      %981 = vmatpush1.msra.mxu0 %v813
      %982 = vmatprep.subr.mxu0 %v876
      %983 = vmatpush2.msra.mxu0 %v875
      %984 = vmatprep.subr.mxu0 %v874
      %985 = vmatpush2.msra.mxu0 %v873
      %986 = vmatprep.subr.mxu0 %v872
      %987 = vmatpush2.msra.mxu0 %v871
      %988 = vmatprep.subr.mxu0 %v870
      %989 = vmatpush2.msra.mxu0 %v869
      %990 = vmatprep.subr.mxu0 %v868
      %991 = vmatpush2.msra.mxu0 %v867
      %992 = vmatprep.subr.mxu0 %v866
      %993 = vmatpush2.msra.mxu0 %v865
      %994 = vmatprep.subr.mxu0 %v864
      %995 = vmatpush2.msra.mxu0 %v863
      %996 = vmatprep.subr.mxu0 %v862
      %997 = vmatpush2.msra.mxu0 %v861
      %998 = vmatprep.subr.mxu0 %v860
      %999 = vmatpush2.msra.mxu0 %v859
      %1000 = vmatprep.subr.mxu0 %v858
      %1001 = vmatpush2.msra.mxu0 %v857
      %1002 = vmatprep.subr.mxu0 %v856
      %1003 = vmatpush2.msra.mxu0 %v855
      %1004 = vmatprep.subr.mxu0 %v854
      %1005 = vmatpush2.msra.mxu0 %v853
      %1006 = vmatprep.subr.mxu0 %v852
      %1007 = vmatpush2.msra.mxu0 %v851
      %1008 = vmatprep.subr.mxu0 %v850
      %1009 = vmatpush2.msra.mxu0 %v849
      %1010 = vmatprep.subr.mxu0 %v848
      %1011 = vmatpush2.msra.mxu0 %v847
      %1012 = vmatprep.subr.mxu0 %v846
      %1013 = vmatpush2.msra.mxu0 %v845
      %1014 = vmatprep.mubr.f32.mxu0 %v748
      %1015 = vmatmul.mubr.f32.gmra.mxu0 %v747
      %v1016 = vpop.f32.mrf.mxu0
      %v1017 = vadd.f32 %v946, %v1016
      %v1018 = vpop.f32.mrf.mxu0
      %v1019 = vadd.f32 %v948, %v1018
      %1020 = vdwg.mxu0
      %v1021 = vxor.u32 %v1017, 2147483648
      %v1022 = vxor.u32 %v1019, 2147483648
      %v1023 = vmul.f32 %v1021, 1.442695
      %v1024 = vpow.pop %v1023
      %v1025 = vmul.f32 %v1022, 1.442695
      %v1026 = vpow.pop %v1025
      %v1027 = vadd.f32 %v1024, 1.0
      %v1028 = vadd.f32 %v1026, 1.0
      %v1029 = vrcp.pop %v1027
      %v1030 = vmul.f32 1.0, %v1029
      %v1031 = vrcp.pop %v1028
      %v1032 = vmul.f32 1.0, %v1031
      %v1033 = vlaneseq
      %v1034 = vshrl.u32 %v1033, 7
      %v1035 = vsub.s32 0, %v1034
      %v1036 = vrot.slane %v1030, %v1035
      %v1037 = vlaneseq
      %v1038 = vshrl.u32 %v1037, 7
      %v1039 = vsub.s32 0, %v1038
      %v1040 = vrot.slane %v1032, %v1039
      %v1041 = vmul.f32 %v1036, %v717
      %v1042 = vmul.f32 %v1040, %v718
      %1043 = vst [vmem:[%s387] sm:$0xf] %v1041
      %1044 = vst [vmem:[%s387 + $0x8] sm:$0xf] %v1042
      %v1045 = vld [vmem:[%s382] sm:$0xff]
      %v1047 = vcombine.low %v1045, %v1045
      %1049 = vst [vmem:[%s387] sm:$0xf0] %v1047
      %1050 = vst [vmem:[%s387 + $0x8] sm:$0xf0] %v1045
      %p1051 = scmp.lt.s32.totalorder %s23, 1
      %s1052 = scalar_select %p1051, %s23, 1
      %s1053 = smul.addr %s1052, 2
      %s1054 = smul.addr %s1053, 8
      %s1055 = scalar_lea.vmem %s11, %s1054
      // Predicated region
      $region65: #{cbam_forward.1} parent=63 // pred_check
        %p1056 = pneg %p277
      $region66: #{cbam_forward.1} parent=63 // pred_check_branch
        %1058 = sbr.rel (%p1056) target = $region68
      $region67: #{cbam_forward.1} parent=63 // pred_region
        _
      $region68: #{cbam_forward.1} parent=63 // pred_fallthru
        _
    $region64: #{cbam_forward.1} parent=5 // pred_fallthru
      _
    %p1059 = scmp.le.s32.totalorder 2, %s18
    // Predicated region
    $region69: #{cbam_forward.1} parent=5 // pred_check
      %p1060 = pneg %p1059
    $region70: #{cbam_forward.1} parent=5 // pred_check_branch
      %1062 = sbr.rel (%p1060) target = $region72
    $region71: #{cbam_forward.1} parent=5 // pred_region
      %s1063 = ssub.s32 %s18, 2
      // Predicated region
      $region73: #{cbam_forward.1} parent=71 // pred_check
        %p1064 = pneg %p283
      $region74: #{cbam_forward.1} parent=71 // pred_check_branch
        %1066 = sbr.rel (%p1064) target = $region76
      $region75: #{cbam_forward.1} parent=71 // pred_region
        %p1067 = scmp.lt.s32.totalorder %s24, 1
        %s1068 = scalar_select %p1067, %s24, 1
        %s1069 = smul.addr %s1068, 2
        %s1070 = smul.addr %s1069, 8
        %s1071 = scalar_lea.vmem %s11, %s1070
      $region76: #{cbam_forward.1} parent=71 // pred_fallthru
        _
    $region72: #{cbam_forward.1} parent=5 // pred_fallthru
      _
  $region6: #{cbam_forward.1} parent=0 // loop_footer
    %s22 = sadd.s32 1, %s18
  $region7: #{cbam_forward.1} parent=0 // loop_footer_branch
    %17 = sbr.rel target = $region3
  $region8: #{cbam_forward.1} parent=0 // loop_exit
    _

</llo_original>
